<compile_context>
chip_gen: v7x
topology: tpu7x:2x2x1
jax: 0.10.0
libtpu: 0.0.40
codegen_flags: <defaults>
</compile_context>

<pallas_src>
import jax
import jax.numpy as jnp
import numpy as np
from jax.experimental import pallas as pl
from jax.experimental.pallas import tpu as pltpu


# ---------------------------------------------------------------------------
# Kernel: q[b, a] = <belief[b], W_s> + <act[b, a], W_a> + b_total
# ---------------------------------------------------------------------------
def dueling_q_kernel(belief_ref, act_ref, w_s_ref, w_a_ref, b_ref, out_ref):
    belief = belief_ref[...]            # (B, 2*state_dim)   VMEM
    act = act_ref[...]                  # (B, A, action_dim) VMEM
    w_s = w_s_ref[...]                  # (1, 2*state_dim)   VMEM
    w_a = w_a_ref[...]                  # (1, action_dim)    VMEM
    b = b_ref[0]                        # folded scalar bias SMEM

    # State path: VPU multiply + lane reduction.  An N=1 / K=16 MXU matmul
    # would occupy the whole systolic array for a single output column.
    s = jnp.sum(belief * w_s, axis=-1, keepdims=True)        # (B, 1)

    # Action path: elementwise multiply + reduce over action_dim.
    a = jnp.sum(act * w_a[None, :, :], axis=-1)              # (B, A)

    out_ref[...] = s + a + b                                  # (B, A)


# ---------------------------------------------------------------------------
# Offline weight folding (plain XLA; refold only when weights change).
# Weights are stored transposed vs. torch: shape (in_features, out_features).
# ---------------------------------------------------------------------------
def fold_params(p):
    w_out = p['wo1'] @ p['wo2']                                   # (E, 1)
    w_s = p['ws1'] @ (p['ws2'] @ w_out)                           # (2*state_dim, 1)
    w_a = p['wa1'] @ (p['wa2'] @ w_out)                           # (action_dim, 1)
    b_tot = ((p['bs1'] @ p['ws2'] + p['bs2']
              + p['ba1'] @ p['wa2'] + p['ba2']) @ w_out
             + p['bo1'] @ p['wo2'] + p['bo2'])                    # (1,)
    return dict(w_s=jnp.asarray(w_s.T, jnp.float32),              # (1, 2*state_dim)
                w_a=jnp.asarray(w_a.T, jnp.float32),              # (1, action_dim)
                b=jnp.asarray(b_tot, jnp.float32))                # (1,)


def dueling_q_forward(belief, act, folded):
    B, A, _ = act.shape
    vmem = pltpu.MemorySpace.VMEM
    smem = pltpu.MemorySpace.SMEM
    return pl.pallas_call(
        dueling_q_kernel,
        out_shape=jax.ShapeDtypeStruct((B, A), jnp.float32),
        in_specs=[
            pl.BlockSpec(memory_space=vmem),   # belief
            pl.BlockSpec(memory_space=vmem),   # act
            pl.BlockSpec(memory_space=vmem),   # folded W_s
            pl.BlockSpec(memory_space=vmem),   # folded W_a
            pl.BlockSpec(memory_space=smem),   # folded scalar bias
        ],
        out_specs=pl.BlockSpec(memory_space=vmem),
    )(belief, act, folded['w_s'], folded['w_a'], folded['b'])


# ---------------------------------------------------------------------------
# Synthetic parameters + unfolded reference (mirrors the torch module exactly)
# ---------------------------------------------------------------------------
def init_params(key, state_dim, action_dim, embed_dim):
    """Deterministic synthetic init. Weights are (in, out); biases are (out,)."""
    def linear(k, fan_in, fan_out):
        k1, k2 = jax.random.split(k)
        bound = 1.0 / np.sqrt(fan_in)
        w = jax.random.uniform(k1, (fan_in, fan_out), jnp.float32, -bound, bound)
        b = jax.random.uniform(k2, (fan_out,), jnp.float32, -bound, bound)
        return w, b

    keys = jax.random.split(key, 6)
    ws1, bs1 = linear(keys[0], state_dim * 2, embed_dim)
    ws2, bs2 = linear(keys[1], embed_dim, embed_dim)
    wa1, ba1 = linear(keys[2], action_dim, embed_dim)
    wa2, ba2 = linear(keys[3], embed_dim, embed_dim)
    wo1, bo1 = linear(keys[4], embed_dim, embed_dim)
    wo2, bo2 = linear(keys[5], embed_dim, 1)
    return dict(ws1=ws1, bs1=bs1, ws2=ws2, bs2=bs2,
                wa1=wa1, ba1=ba1, wa2=wa2, ba2=ba2,
                wo1=wo1, bo1=bo1, wo2=wo2, bo2=bo2)


def reference_forward(belief, act, p):
    """Layer-by-layer forward, identical to the PyTorch module."""
    s = (belief @ p['ws1'] + p['bs1']) @ p['ws2'] + p['bs2']      # (B, E)
    a = jnp.einsum('bad,de->bae', act, p['wa1']) + p['ba1']
    a = jnp.einsum('bae,ef->baf', a, p['wa2']) + p['ba2']         # (B, A, E)
    h = s[:, None, :] + a
    o = jnp.einsum('bae,ef->baf', h, p['wo1']) + p['bo1']
    q = jnp.einsum('bae,ef->baf', o, p['wo2']) + p['bo2']
    return q[..., 0]                                              # (B, A)


if __name__ == "__main__":
    # Small shapes consistent with the module's forward signature.
    batch_size = 2
    state_dim = 8          # belief_states: (B, state_dim * 2) = (2, 16)
    action_dim = 4
    action_space = 8       # candidate_action_features: (2, 8, 4)
    embed_dim = 128

    key = jax.random.PRNGKey(0)
    k_b, k_a, k_p = jax.random.split(key, 3)

    belief = jax.random.normal(k_b, (batch_size, state_dim * 2), jnp.float32)
    act = jax.random.normal(k_a, (batch_size, action_space, action_dim), jnp.float32)
    params = init_params(k_p, state_dim, action_dim, embed_dim)

    folded = jax.tree_util.tree_map(jax.block_until_ready, fold_params(params))

    q_out = dueling_q_forward(belief, act, folded)
    q_out = jax.block_until_ready(q_out)

    q_ref = jax.block_until_ready(reference_forward(belief, act, params))
    # Folding is exact algebra; only fp32 reassociation error remains.
    np.testing.assert_allclose(np.asarray(q_out), np.asarray(q_ref),
                               rtol=1e-4, atol=1e-4)
    assert q_out.shape == (batch_size, action_space)

    print("KERNEL_OK")
</pallas_src>

<mosaic_0001>
module attributes {stable_mosaic.version = 11 : i64} {
  func.func @dueling_q_kernel(%arg0: memref<2x16xf32, #tpu.memory_space<vmem>>, %arg1: memref<2x8x4xf32, #tpu.memory_space<vmem>>, %arg2: memref<1x16xf32, #tpu.memory_space<vmem>>, %arg3: memref<1x4xf32, #tpu.memory_space<vmem>>, %arg4: memref<1xf32, #tpu.memory_space<smem>>, %arg5: memref<2x8xf32, #tpu.memory_space<vmem>>) attributes {dimension_semantics = [], scalar_prefetch = 0 : i64, scratch_operands = 0 : i64, tpu.core_type = #tpu.core_type<tc>} {
    %c0 = arith.constant 0 : index
    %c0_0 = arith.constant 0 : index
    %0 = vector.load %arg0[%c0, %c0_0] : memref<2x16xf32, #tpu.memory_space<vmem>>, vector<2x16xf32>
    %c0_1 = arith.constant 0 : index
    %c0_2 = arith.constant 0 : index
    %c0_3 = arith.constant 0 : index
    %1 = vector.load %arg1[%c0_1, %c0_2, %c0_3] : memref<2x8x4xf32, #tpu.memory_space<vmem>>, vector<2x8x4xf32>
    %c0_4 = arith.constant 0 : index
    %c0_5 = arith.constant 0 : index
    %2 = vector.load %arg2[%c0_4, %c0_5] : memref<1x16xf32, #tpu.memory_space<vmem>>, vector<1x16xf32>
    %c0_6 = arith.constant 0 : index
    %c0_7 = arith.constant 0 : index
    %3 = vector.load %arg3[%c0_6, %c0_7] : memref<1x4xf32, #tpu.memory_space<vmem>>, vector<1x4xf32>
    %c0_8 = arith.constant 0 : index
    %4 = memref.load %arg4[%c0_8] : memref<1xf32, #tpu.memory_space<smem>>
    %5 = vector.broadcast %2 : vector<1x16xf32> to vector<2x16xf32>
    %6 = arith.mulf %0, %5 : vector<2x16xf32>
    %cst = arith.constant dense<0.000000e+00> : vector<2xf32>
    %7 = vector.multi_reduction <add>, %6, %cst [1] : vector<2x16xf32> to vector<2xf32>
    %8 = vector.shape_cast %7 : vector<2xf32> to vector<2x1xf32>
    %9 = vector.shape_cast %3 : vector<1x4xf32> to vector<1x1x4xf32>
    %10 = vector.broadcast %9 : vector<1x1x4xf32> to vector<2x8x4xf32>
    %11 = arith.mulf %1, %10 : vector<2x8x4xf32>
    %cst_9 = arith.constant dense<0.000000e+00> : vector<2x8xf32>
    %12 = vector.multi_reduction <add>, %11, %cst_9 [2] : vector<2x8x4xf32> to vector<2x8xf32>
    %13 = vector.broadcast %8 : vector<2x1xf32> to vector<2x8xf32>
    %14 = arith.addf %13, %12 : vector<2x8xf32>
    %15 = vector.broadcast %4 : f32 to vector<2x8xf32>
    %16 = arith.addf %14, %15 : vector<2x8xf32>
    %c0_10 = arith.constant 0 : index
    %c0_11 = arith.constant 0 : index
    %17 = vector.load %arg5[%c0_10, %c0_11] : memref<2x8xf32, #tpu.memory_space<vmem>>, vector<2x8xf32>
    tpu.vector_store %arg5[%c0_10, %c0_11], %16 {strides = array<i32>} : memref<2x8xf32, #tpu.memory_space<vmem>>, vector<2x8xf32>,
    return
  }
}

</mosaic_0001>

<llo_original>
// kernel: tpu_custom_call.1
$region0: #{tpu_custom_call.1}
  #allocation0 [shape = 'u32[]', space=smem, size = 0x4, offset = 0x4, fixed_abs, tag = 'smem constant byte address 0x4 - core index']
  #allocation1 [shape = 'u32[144,128]{1,0:T(1,128)}', space=vmem, size = 0x12000, scoped, tag = 'internal scratch']
  #allocation2 [shape = 'f32[1]{0:T(128)S(6)}', space=smem, size = 0x200, scoped, tag = 'scoped memory for tpu_custom_call.1']
  %s0 = inlined_call_operand.vmem [shape: f32[2,16], index: 0, kind: input, shape index: {}]
  %s1 = inlined_call_operand.vmem [shape: f32[2,8,4], index: 1, kind: input, shape index: {}]
  %s2 = inlined_call_operand.vmem [shape: f32[1,16], index: 2, kind: input, shape index: {}]
  %s3 = inlined_call_operand.vmem [shape: f32[1,4], index: 3, kind: input, shape index: {}]
  %s4 = inlined_call_operand.<no memory space> [shape: f32[1], index: 4, kind: input, shape index: {}]
  %s5 = inlined_call_operand.hbm [shape: f32[2,8], index: 5, kind: output, shape index: {}]
  %s6 = sld [smem:[#allocation0]]
  $region30: #{tpu_custom_call.1} parent=0
    _
  %s8 = ssub.s32 1, %s6
  %s9 = scalar_select 0, %s8, %s6
  %10 = sst [smem:[#allocation2]] %s4
  $region1: #{tpu_custom_call.1} parent=0
    #allocation3 [shape = 'u8[1024]{0}', space=vmem, size = 0x400, scoped, tag = 'output window, operand 0, single buffered']
    #allocation4 [shape = 's32[1]{0}', space=sflag, size = 0x4, scoped, tag = 'scoped memory for tpu_custom_call.1']
    %11 = vsyncpa [#allocation4], 0
    // Predicated region
    $region2: #{tpu_custom_call.1} parent=1 // pred_check
      _
    $region3: #{tpu_custom_call.1} parent=1 // pred_check_branch
      %13 = sbr.rel (0) target = $region5
    $region4: #{tpu_custom_call.1} parent=1 // pred_region
      _
    $region5: #{tpu_custom_call.1} parent=1 // pred_fallthru
      _
    // Predicated region
    $region6: #{tpu_custom_call.1} parent=1 // pred_check
      _
    $region7: #{tpu_custom_call.1} parent=1 // pred_check_branch
      %15 = sbr.rel (0) target = $region9
    $region8: #{tpu_custom_call.1} parent=1 // pred_region
      _
    $region9: #{tpu_custom_call.1} parent=1 // pred_fallthru
      _
    // Predicated region
    $region10: #{tpu_custom_call.1} parent=1 // pred_check
      _
    $region11: #{tpu_custom_call.1} parent=1 // pred_check_branch
      %17 = sbr.rel (0) target = $region13
    $region12: #{tpu_custom_call.1} parent=1 // pred_region
      _
    $region13: #{tpu_custom_call.1} parent=1 // pred_fallthru
      _
    // Predicated region
    $region14: #{tpu_custom_call.1} parent=1 // pred_check
      _
    $region15: #{tpu_custom_call.1} parent=1 // pred_check_branch
      %19 = sbr.rel (0) target = $region17
    $region16: #{tpu_custom_call.1} parent=1 // pred_region
      _
    $region17: #{tpu_custom_call.1} parent=1 // pred_fallthru
      _
    // Predicated region
    $region18: #{tpu_custom_call.1} parent=1 // pred_check
      _
    $region19: #{tpu_custom_call.1} parent=1 // pred_check_branch
      %21 = sbr.rel (0) target = $region21
    $region20: #{tpu_custom_call.1} parent=1 // pred_region
      _
    $region21: #{tpu_custom_call.1} parent=1 // pred_fallthru
      _
    %v22 = vld [vmem:[%s0] sm:$0x3]
    %v23 = vld [vmem:[%s1] sm:$0xff]
    %v24 = vld [vmem:[%s1 + $0x8] sm:$0xff]
    %v25 = vld [vmem:[%s2] sm:$0x1]
    %v26 = vld [vmem:[%s3] sm:$0x1]
    %s27 = sld [smem:[#allocation2]]
    %v29 = vlaneseq
    %v30 = vshrl.u32 %v29, 7
    %v31 = vsub.s32 0, %v30
    %v32 = vrot.slane %v25, %v31
    %v34 = vmul.f32 %v22, %v32
    %vm35 = vcmask 123904
    %v36 = vsel %vm35, %v34, 0.0
    %37 = vadd.xlane.f32.xlu0 %v36
    %v38 = vpop.xlane.xlu0 %37
    %v40 = vlaneseq
    %v41 = vshrl.u32 %v40, 7
    %v42 = vsub.s32 0, %v41
    %v43 = vrot.slane %v26, %v42
    %v45 = vmul.f32 %v23, %v43
    %v46 = vmul.f32 %v24, %v43
    %vm47 = vcmask 31744
    %v48 = vsel %vm47, %v45, 0.0
    %49 = vadd.xlane.f32.xlu0 %v48
    %v50 = vpop.xlane.xlu0 %49
    %v51 = vsel %vm47, %v46, 0.0
    %52 = vadd.xlane.f32.xlu0 %v51
    %v53 = vpop.xlane.xlu0 %52
    %v56 = vlaneseq
    %v57 = vand.u32 %v56, 127
    %v58 = vlaneseq
    %v59 = vshrl.u32 %v58, 7
    %v60 = vsub.s32 %v57, %v59
    %v61 = vrot.slane %v50, %v60
    %v62 = vlaneseq
    %v63 = vshrl.u32 %v62, 7
    %v64 = vsub.s32 %v57, %v63
    %v65 = vrot.slane %v53, %v64
    %vm66 = vcmask 1041409
    %v67 = vsel %vm66, %v65, %v61
    %v69 = vadd.f32 %v38, %v67
    %v70 = vstv %s27
    %v71 = vadd.f32 %v69, %v70
    %vm72 = vcmask 58368
    %73 = vst.msk [vmem:[#allocation3] sm:$0x3] %vm72, %v71
    // Predicated region
    $region22: #{tpu_custom_call.1} parent=1 // pred_check
      _
    $region23: #{tpu_custom_call.1} parent=1 // pred_check_branch
      %75 = sbr.rel (0) target = $region25
    $region24: #{tpu_custom_call.1} parent=1 // pred_region
      %s77 = ssub.s32 32, 32
      %78 = vsyncadd [#allocation4], %s77
      %s80 = sshll.u32 [#allocation3], 4
      %s81 = int_to_ptr.vmem [resolvable:$true] %s80
      %83 = dma.vmem_to_hbm [thread:$0]  %s81, 32, %s5, [#allocation4]
    $region25: #{tpu_custom_call.1} parent=1 // pred_fallthru
      _
    // Predicated region
    $region26: #{tpu_custom_call.1} parent=1 // pred_check
      _
    $region27: #{tpu_custom_call.1} parent=1 // pred_check_branch
      %85 = sbr.rel (0) target = $region29
    $region28: #{tpu_custom_call.1} parent=1 // pred_region
      %86 = dma.done [#allocation4], 32
    $region29: #{tpu_custom_call.1} parent=1 // pred_fallthru
      _
    %87 = vsyncpa [#allocation4], 1

</llo_original>
